<compile_context>
chip_gen: v7x
topology: tpu7x:2x2x1
jax: 0.10.0
libtpu: 0.0.40
codegen_flags: <defaults>
</compile_context>

<pallas_src>
import functools

import jax
import jax.numpy as jnp
import numpy as np
from jax.experimental import pallas as pl
from jax.experimental.pallas import tpu as pltpu


# ----------------------------------------------------------------------------
# Fused kernel: conv1 + ReLU + conv2 + ReLU + (fc_mu | fc_logvar) heads.
# ----------------------------------------------------------------------------
def _encoder_kernel(x1_ref, w1_ref, w2_ref, b2_ref, wh_ref, bh_ref, o_ref, *,
                    b_blk, g, oh2):
    """Per grid step (one batch block of b_blk elements):

    x1_ref: (1, b_blk*2*g, K1)  bf16  conv1 row-features; per element the first g
                                       rows are the EVEN padded conv1 output rows,
                                       the next g rows are the ODD ones.  The last
                                       feature is 1.0 (0.0 on padding rows) so the
                                       conv1 bias rides inside w1.
    w1_ref: (K1, N1)            bf16  N1 = 16*C1: one full padded conv1 row on lanes.
    w2_ref: (4*N1, N2)          bf16  N2 = 8*C2 (lane-padded): conv2 output row.
    b2_ref: (1, N2)             f32
    wh_ref: (oh2*N2, HN)        bf16  fused fc_mu/fc_logvar weights (HN lane-padded).
    bh_ref: (1, HN)             f32
    o_ref : (1, b_blk, HN)      f32   lane-dense head outputs.
    """
    # ---- conv1 + ReLU: one matmul for the whole batch block.  Zero padding rows
    # stay exactly zero because their input (incl. the ones/bias feature) is zero.
    h1 = jnp.dot(x1_ref[0], w1_ref[...], preferred_element_type=jnp.float32)
    h1 = jnp.maximum(h1, 0.0)                       # (b_blk*2g, N1) f32

    feats = []
    for b in range(b_blk):
        pe = h1[b * 2 * g: b * 2 * g + g, :]        # even padded conv1 rows P[0],P[2],..
        po = h1[b * 2 * g + g: (b + 1) * 2 * g, :]  # odd padded conv1 rows  P[1],P[3],..
        # conv2 receptive field of output row oy = padded conv1 rows 2oy .. 2oy+3.
        # Each piece is a full-width (N1-lane) slab, so the concat is lane-aligned.
        a = jnp.concatenate(
            [pe[0:oh2, :], po[0:oh2, :], pe[1:oh2 + 1, :], po[1:oh2 + 1, :]],
            axis=1).astype(jnp.bfloat16)            # (oh2, 4*N1)
        h2 = jnp.dot(a, w2_ref[...], preferred_element_type=jnp.float32)
        h2 = jnp.maximum(h2 + b2_ref[...], 0.0)     # (oh2, N2) f32; pad lanes == 0
        # Flatten (oy, lanes) onto lanes by concatenating full-width row pieces.
        feats.append(jnp.concatenate(
            [h2[oy:oy + 1, :] for oy in range(oh2)],
            axis=1).astype(jnp.bfloat16))           # (1, oh2*N2)

    x_flat = feats[0] if b_blk == 1 else jnp.concatenate(feats, axis=0)

    heads = jnp.dot(x_flat, wh_ref[...], preferred_element_type=jnp.float32)
    heads = heads + bh_ref[...]                     # (b_blk, HN) f32
    o_ref[0, :, :] = heads.astype(o_ref.dtype)


# ----------------------------------------------------------------------------
# Wrapper glue: build one feature row per padded conv1 output row (even rows
# first, then odd rows), with a trailing ones-feature carrying the conv1 bias.
# ----------------------------------------------------------------------------
def _build_conv1_rows(x, k1_padded):
    n, cin, h, w = x.shape
    oh1 = h // 2                      # conv1 output spatial
    oh1p = oh1 + 2                    # zero-padded conv1 output spatial
    g = oh1p // 2                     # rows per parity
    wpad = w + 2

    xp = jnp.pad(x.transpose(0, 2, 3, 1), ((0, 0), (1, 1), (1, 1), (0, 0)))
    # Sliding windows of 4 input rows with stride 2: window i = rows 2i .. 2i+3.
    a = xp[:, :h, :, :].reshape(n, oh1, 2, wpad, cin)
    b = xp[:, 2:h + 2, :, :].reshape(n, oh1, 2, wpad, cin)
    slabs = jnp.concatenate([a, b], axis=2).reshape(n, oh1, 4 * wpad * cin)
    ones = jnp.ones((n, oh1, 1), slabs.dtype)
    slabs = jnp.concatenate([slabs, ones], axis=2)           # (n, oh1, K1_raw)
    k1 = slabs.shape[2]
    zero = jnp.zeros((n, 1, k1), slabs.dtype)
    # Padded conv1 output row r corresponds to window r-1; rows 0 and oh1p-1 are pad.
    even = jnp.concatenate([zero, slabs[:, 1::2]], axis=1)   # rows 0,2,...   (g rows)
    odd = jnp.concatenate([slabs[:, 0::2], zero], axis=1)    # rows 1,3,...   (g rows)
    rows = jnp.concatenate([even, odd], axis=1)              # (n, 2g, K1_raw)
    rows = jnp.pad(rows, ((0, 0), (0, 0), (0, k1_padded - k1)))
    return rows.reshape(n * 2 * g, k1_padded).astype(jnp.bfloat16)


def _pick_b_blk(n):
    # Prefer >= 2 grid steps (v7x has 2 TensorCores) while amortizing per-step cost.
    for b in (8, 4, 2):
        if n % b == 0 and n // b >= 2:
            return b
    return 1


# ----------------------------------------------------------------------------
# One-time parameter preparation (pre-scatter / permute / pad / cast).
# ----------------------------------------------------------------------------
def prepare_encoder_params(params, *, in_size):
    w1 = np.asarray(params["conv1_w"], np.float32)   # (C1, cin, 4, 4)
    b1 = np.asarray(params["conv1_b"], np.float32)
    w2 = np.asarray(params["conv2_w"], np.float32)   # (C2, C1, 4, 4)
    b2 = np.asarray(params["conv2_b"], np.float32)
    wm = np.asarray(params["fc_mu_w"], np.float32)   # (L, C2*img*img)
    bm = np.asarray(params["fc_mu_b"], np.float32)
    wl = np.asarray(params["fc_logvar_w"], np.float32)
    bl = np.asarray(params["fc_logvar_b"], np.float32)

    c1, cin = w1.shape[0], w1.shape[1]
    c2 = w2.shape[0]
    latent = wm.shape[0]

    oh1 = in_size // 2
    oh1p = oh1 + 2
    oh2 = oh1 // 2
    wpad = in_size + 2

    k1_raw = 4 * wpad * cin + 1                      # +1 ones/bias feature
    k1 = ((k1_raw + 127) // 128) * 128
    n1 = oh1p * c1                                   # lanes of one padded conv1 row
    n2 = ((oh2 * c2 + 127) // 128) * 128             # lanes of one conv2 output row
    kh = oh2 * n2
    head_n = max(128, ((2 * latent + 127) // 128) * 128)

    # ---- W1big[(ky, px, cin), (q, c1)]: full padded conv1 output row per matmul row.
    W1 = np.zeros((k1, n1), np.float32)
    for q in range(1, oh1p - 1):                     # q=0 / q=oh1p-1 stay zero (padding)
        for ky in range(4):
            for kx in range(4):
                px = 2 * q - 2 + kx
                r0 = ky * wpad * cin + px * cin
                W1[r0:r0 + cin, q * c1:(q + 1) * c1] = w1[:, :, ky, kx].T
        W1[k1_raw - 1, q * c1:(q + 1) * c1] = b1     # bias via the ones-feature

    # ---- W2big[(ky, px, c1), (ox, c2)]: all (ox, channel) conv2 outputs on lanes.
    W2 = np.zeros((4 * n1, n2), np.float32)
    B2 = np.zeros((1, n2), np.float32)
    for ox in range(oh2):
        for ky in range(4):
            for kx in range(4):
                px = 2 * ox + kx
                W2[ky * n1 + px * c1: ky * n1 + (px + 1) * c1,
                   ox * c2:(ox + 1) * c2] = w2[:, :, ky, kx].T
        B2[0, ox * c2:(ox + 1) * c2] = b2

    # ---- Whead[(oy, ox, c2), l]: fused fc_mu/fc_logvar, rows match the kernel's
    # feature layout (oy on 128-lane groups, (ox, c2) within), torch .view order
    # (c2, oy, ox) is absorbed here.
    WH4 = np.zeros((oh2, n2, head_n), np.float32)
    perm_mu = wm.reshape(latent, c2, oh2, oh2).transpose(2, 3, 1, 0).reshape(
        oh2, oh2 * c2, latent)
    perm_lv = wl.reshape(latent, c2, oh2, oh2).transpose(2, 3, 1, 0).reshape(
        oh2, oh2 * c2, latent)
    WH4[:, :oh2 * c2, :latent] = perm_mu
    WH4[:, :oh2 * c2, latent:2 * latent] = perm_lv
    WH = WH4.reshape(kh, head_n)
    BH = np.zeros((1, head_n), np.float32)
    BH[0, :latent] = bm
    BH[0, latent:2 * latent] = bl

    return {
        "w1": jnp.asarray(W1, jnp.bfloat16),
        "w2": jnp.asarray(W2, jnp.bfloat16),
        "b2": jnp.asarray(B2, jnp.float32),
        "wh": jnp.asarray(WH, jnp.bfloat16),
        "bh": jnp.asarray(BH, jnp.float32),
    }


# ----------------------------------------------------------------------------
# Forward pass (class_nr = 0).
# ----------------------------------------------------------------------------
def encoder_forward(prep, x, *, latent_dims):
    n, _, h, _ = x.shape
    oh1 = h // 2
    g = (oh1 + 2) // 2
    oh2 = oh1 // 2

    k1 = prep["w1"].shape[0]
    n1 = prep["w1"].shape[1]
    n2 = prep["w2"].shape[1]
    kh = prep["wh"].shape[0]
    head_n = prep["wh"].shape[1]

    b_blk = _pick_b_blk(n)
    grid_n = n // b_blk

    x1 = _build_conv1_rows(x, k1).reshape(grid_n, b_blk * 2 * g, k1)

    out = pl.pallas_call(
        functools.partial(_encoder_kernel, b_blk=b_blk, g=g, oh2=oh2),
        out_shape=jax.ShapeDtypeStruct((grid_n, b_blk, head_n), jnp.float32),
        grid=(grid_n,),
        in_specs=[
            pl.BlockSpec((1, b_blk * 2 * g, k1), lambda b: (b, 0, 0)),
            pl.BlockSpec((k1, n1), lambda b: (0, 0)),
            pl.BlockSpec((4 * n1, n2), lambda b: (0, 0)),
            pl.BlockSpec((1, n2), lambda b: (0, 0)),
            pl.BlockSpec((kh, head_n), lambda b: (0, 0)),
            pl.BlockSpec((1, head_n), lambda b: (0, 0)),
        ],
        out_specs=pl.BlockSpec((1, b_blk, head_n), lambda b: (b, 0, 0)),
        compiler_params=pltpu.CompilerParams(dimension_semantics=("parallel",)),
    )(x1, prep["w1"], prep["w2"], prep["b2"], prep["wh"], prep["bh"])

    heads = out.reshape(n, head_n)
    mu = heads[:, :latent_dims]
    logvar = heads[:, latent_dims:2 * latent_dims]
    return mu, logvar


# ----------------------------------------------------------------------------
# Parameter init (torch-layout, same as nn.Module) + pure-JAX reference.
# ----------------------------------------------------------------------------
def init_encoder_params(key, *, in_channels=1, c=8, latent_dims=10, img_dim=7):
    ks = jax.random.split(key, 8)

    def mk(k, shape, scale):
        return (scale * jax.random.normal(k, shape)).astype(jnp.float32)

    feat = 2 * c * img_dim * img_dim
    return {
        "conv1_w": mk(ks[0], (c, in_channels, 4, 4), 0.10),
        "conv1_b": mk(ks[1], (c,), 0.10),
        "conv2_w": mk(ks[2], (2 * c, c, 4, 4), 0.05),
        "conv2_b": mk(ks[3], (2 * c,), 0.05),
        "fc_mu_w": mk(ks[4], (latent_dims, feat), 0.02),       # torch Linear: (out, in)
        "fc_mu_b": mk(ks[5], (latent_dims,), 0.02),
        "fc_logvar_w": mk(ks[6], (latent_dims, feat), 0.02),
        "fc_logvar_b": mk(ks[7], (latent_dims,), 0.02),
    }


def _ref_forward(params, x):
    dn = ("NCHW", "OIHW", "NCHW")

    def conv(x, w, b):
        y = jax.lax.conv_general_dilated(
            x, w, window_strides=(2, 2), padding=[(1, 1), (1, 1)],
            dimension_numbers=dn, precision=jax.lax.Precision.HIGHEST)
        return jnp.maximum(y + b[None, :, None, None], 0.0)

    h = conv(x, params["conv1_w"], params["conv1_b"])
    h = conv(h, params["conv2_w"], params["conv2_b"])
    flat = h.reshape(h.shape[0], -1)
    mu = flat @ params["fc_mu_w"].T + params["fc_mu_b"]
    logvar = flat @ params["fc_logvar_w"].T + params["fc_logvar_b"]
    return mu, logvar


if __name__ == "__main__":
    key = jax.random.PRNGKey(0)
    k_params, k_x = jax.random.split(key)

    batch, in_channels, in_size = 2, 1, 28
    c, latent_dims = 8, 10
    img_dim = 7  # in_size == 28

    params = init_encoder_params(
        k_params, in_channels=in_channels, c=c, latent_dims=latent_dims, img_dim=img_dim)
    x = jax.random.normal(k_x, (batch, in_channels, in_size, in_size), dtype=jnp.float32)

    prep = prepare_encoder_params(params, in_size=in_size)
    fwd = jax.jit(functools.partial(encoder_forward, latent_dims=latent_dims))

    mu, logvar = fwd(prep, x)
    mu, logvar = jax.block_until_ready((mu, logvar))

    assert mu.shape == (batch, latent_dims) and logvar.shape == (batch, latent_dims)

    mu_ref, logvar_ref = _ref_forward(params, x)
    np.testing.assert_allclose(np.asarray(mu), np.asarray(mu_ref), rtol=2e-2, atol=2e-2)
    np.testing.assert_allclose(np.asarray(logvar), np.asarray(logvar_ref), rtol=2e-2, atol=2e-2)

    print("KERNEL_OK")
</pallas_src>

<mosaic_0001>
module attributes {stable_mosaic.version = 11 : i64} {
  func.func @_encoder_kernel(%arg0: i32, %arg1: memref<1x16x128xbf16, #tpu.memory_space<vmem>>, %arg2: memref<128x128xbf16, #tpu.memory_space<vmem>>, %arg3: memref<512x128xbf16, #tpu.memory_space<vmem>>, %arg4: memref<1x128xf32, #tpu.memory_space<vmem>>, %arg5: memref<896x128xbf16, #tpu.memory_space<vmem>>, %arg6: memref<1x128xf32, #tpu.memory_space<vmem>>, %arg7: memref<1x1x128xf32, #tpu.memory_space<vmem>>) attributes {dimension_semantics = [#tpu.dimension_semantics<parallel>], iteration_bounds = array<i64: 2>, scalar_prefetch = 0 : i64, scratch_operands = 0 : i64, tpu.core_type = #tpu.core_type<tc>, window_params = [{transform_indices = @transform_0, window_bounds = array<i64: 1, 16, 128>}, {pipeline_mode = #tpu.pipeline_mode<synchronous>, transform_indices = @transform_1, window_bounds = array<i64: 128, 128>}, {pipeline_mode = #tpu.pipeline_mode<synchronous>, transform_indices = @transform_2, window_bounds = array<i64: 512, 128>}, {pipeline_mode = #tpu.pipeline_mode<synchronous>, transform_indices = @transform_3, window_bounds = array<i64: 1, 128>}, {pipeline_mode = #tpu.pipeline_mode<synchronous>, transform_indices = @transform_4, window_bounds = array<i64: 896, 128>}, {pipeline_mode = #tpu.pipeline_mode<synchronous>, transform_indices = @transform_5, window_bounds = array<i64: 1, 128>}, {transform_indices = @transform_6, window_bounds = array<i64: 1, 1, 128>}]} {
    %c0 = arith.constant 0 : index
    %c0_0 = arith.constant 0 : index
    %c0_1 = arith.constant 0 : index
    %0 = vector.load %arg1[%c0, %c0_0, %c0_1] : memref<1x16x128xbf16, #tpu.memory_space<vmem>>, vector<1x16x128xbf16>
    %1 = vector.shape_cast %0 : vector<1x16x128xbf16> to vector<16x128xbf16>
    %c0_2 = arith.constant 0 : index
    %c0_3 = arith.constant 0 : index
    %2 = vector.load %arg2[%c0_2, %c0_3] : memref<128x128xbf16, #tpu.memory_space<vmem>>, vector<128x128xbf16>
    %cst = arith.constant dense<0.000000e+00> : vector<16x128xf32>
    %3 = tpu.matmul %1, %2, %cst {dimension_numbers = #tpu.dot_dimension_numbers<[1], [0], [0], [1], [0, 0, 1, 1], [], []>} : vector<16x128xbf16>, vector<128x128xbf16>, vector<16x128xf32> -> vector<16x128xf32>
    %cst_4 = arith.constant 0.000000e+00 : f32
    %4 = vector.broadcast %cst_4 : f32 to vector<16x128xf32>
    %5 = arith.maximumf %3, %4 : vector<16x128xf32>
    %6 = vector.extract_strided_slice %5 {offsets = [0, 0], sizes = [8, 128], strides = [1, 1]} : vector<16x128xf32> to vector<8x128xf32>
    %7 = vector.extract_strided_slice %5 {offsets = [8, 0], sizes = [8, 128], strides = [1, 1]} : vector<16x128xf32> to vector<8x128xf32>
    %8 = vector.extract_strided_slice %6 {offsets = [0, 0], sizes = [7, 128], strides = [1, 1]} : vector<8x128xf32> to vector<7x128xf32>
    %9 = vector.extract_strided_slice %7 {offsets = [0, 0], sizes = [7, 128], strides = [1, 1]} : vector<8x128xf32> to vector<7x128xf32>
    %10 = vector.extract_strided_slice %6 {offsets = [1, 0], sizes = [7, 128], strides = [1, 1]} : vector<8x128xf32> to vector<7x128xf32>
    %11 = vector.extract_strided_slice %7 {offsets = [1, 0], sizes = [7, 128], strides = [1, 1]} : vector<8x128xf32> to vector<7x128xf32>
    %12 = tpu.concatenate %8, %9, %10, %11 in 1 : vector<7x128xf32>, vector<7x128xf32>, vector<7x128xf32>, vector<7x128xf32> -> vector<7x512xf32>
    %13 = arith.truncf %12 : vector<7x512xf32> to vector<7x512xbf16>
    %c0_5 = arith.constant 0 : index
    %c0_6 = arith.constant 0 : index
    %14 = vector.load %arg3[%c0_5, %c0_6] : memref<512x128xbf16, #tpu.memory_space<vmem>>, vector<512x128xbf16>
    %cst_7 = arith.constant dense<0.000000e+00> : vector<7x128xf32>
    %15 = tpu.matmul %13, %14, %cst_7 {dimension_numbers = #tpu.dot_dimension_numbers<[1], [0], [0], [1], [0, 0, 1, 1], [], []>} : vector<7x512xbf16>, vector<512x128xbf16>, vector<7x128xf32> -> vector<7x128xf32>
    %c0_8 = arith.constant 0 : index
    %c0_9 = arith.constant 0 : index
    %16 = vector.load %arg4[%c0_8, %c0_9] : memref<1x128xf32, #tpu.memory_space<vmem>>, vector<1x128xf32>
    %17 = vector.broadcast %16 : vector<1x128xf32> to vector<7x128xf32>
    %18 = arith.addf %15, %17 : vector<7x128xf32>
    %cst_10 = arith.constant 0.000000e+00 : f32
    %19 = vector.broadcast %cst_10 : f32 to vector<7x128xf32>
    %20 = arith.maximumf %18, %19 : vector<7x128xf32>
    %21 = vector.extract_strided_slice %20 {offsets = [0, 0], sizes = [1, 128], strides = [1, 1]} : vector<7x128xf32> to vector<1x128xf32>
    %22 = vector.extract_strided_slice %20 {offsets = [1, 0], sizes = [1, 128], strides = [1, 1]} : vector<7x128xf32> to vector<1x128xf32>
    %23 = vector.extract_strided_slice %20 {offsets = [2, 0], sizes = [1, 128], strides = [1, 1]} : vector<7x128xf32> to vector<1x128xf32>
    %24 = vector.extract_strided_slice %20 {offsets = [3, 0], sizes = [1, 128], strides = [1, 1]} : vector<7x128xf32> to vector<1x128xf32>
    %25 = vector.extract_strided_slice %20 {offsets = [4, 0], sizes = [1, 128], strides = [1, 1]} : vector<7x128xf32> to vector<1x128xf32>
    %26 = vector.extract_strided_slice %20 {offsets = [5, 0], sizes = [1, 128], strides = [1, 1]} : vector<7x128xf32> to vector<1x128xf32>
    %27 = vector.extract_strided_slice %20 {offsets = [6, 0], sizes = [1, 128], strides = [1, 1]} : vector<7x128xf32> to vector<1x128xf32>
    %28 = tpu.concatenate %21, %22, %23, %24, %25, %26, %27 in 1 : vector<1x128xf32>, vector<1x128xf32>, vector<1x128xf32>, vector<1x128xf32>, vector<1x128xf32>, vector<1x128xf32>, vector<1x128xf32> -> vector<1x896xf32>
    %29 = arith.truncf %28 : vector<1x896xf32> to vector<1x896xbf16>
    %c0_11 = arith.constant 0 : index
    %c0_12 = arith.constant 0 : index
    %30 = vector.load %arg5[%c0_11, %c0_12] : memref<896x128xbf16, #tpu.memory_space<vmem>>, vector<896x128xbf16>
    %cst_13 = arith.constant dense<0.000000e+00> : vector<1x128xf32>
    %31 = tpu.matmul %29, %30, %cst_13 {dimension_numbers = #tpu.dot_dimension_numbers<[1], [0], [0], [1], [0, 0, 1, 1], [], []>} : vector<1x896xbf16>, vector<896x128xbf16>, vector<1x128xf32> -> vector<1x128xf32>
    %c0_14 = arith.constant 0 : index
    %c0_15 = arith.constant 0 : index
    %32 = vector.load %arg6[%c0_14, %c0_15] : memref<1x128xf32, #tpu.memory_space<vmem>>, vector<1x128xf32>
    %33 = arith.addf %31, %32 : vector<1x128xf32>
    %c0_16 = arith.constant 0 : index
    %c0_17 = arith.constant 0 : index
    %c0_18 = arith.constant 0 : index
    %34 = vector.load %arg7[%c0_16, %c0_17, %c0_18] : memref<1x1x128xf32, #tpu.memory_space<vmem>>, vector<1x1x128xf32>
    %35 = vector.shape_cast %34 : vector<1x1x128xf32> to vector<1x128xf32>
    %36 = vector.shape_cast %33 : vector<1x128xf32> to vector<1x1x128xf32>
    tpu.vector_store %arg7[%c0_16, %c0_17, %c0_18], %36 {strides = array<i32>} : memref<1x1x128xf32, #tpu.memory_space<vmem>>, vector<1x1x128xf32>,
    return
  }
  func.func @transform_0(%arg0: i32) -> (i32, i32, i32) {
    %c0_i32 = arith.constant 0 : i32
    %c0_i32_0 = arith.constant 0 : i32
    %c0_i32_1 = arith.constant 0 : i32
    return %arg0, %c0_i32, %c0_i32_0 : i32, i32, i32
  }
  func.func @transform_1(%arg0: i32) -> (i32, i32) {
    %c0_i32 = arith.constant 0 : i32
    %c0_i32_0 = arith.constant 0 : i32
    %c0_i32_1 = arith.constant 0 : i32
    return %c0_i32, %c0_i32_0 : i32, i32
  }
  func.func @transform_2(%arg0: i32) -> (i32, i32) {
    %c0_i32 = arith.constant 0 : i32
    %c0_i32_0 = arith.constant 0 : i32
    %c0_i32_1 = arith.constant 0 : i32
    return %c0_i32, %c0_i32_0 : i32, i32
  }
  func.func @transform_3(%arg0: i32) -> (i32, i32) {
    %c0_i32 = arith.constant 0 : i32
    %c0_i32_0 = arith.constant 0 : i32
    %c0_i32_1 = arith.constant 0 : i32
    return %c0_i32, %c0_i32_0 : i32, i32
  }
  func.func @transform_4(%arg0: i32) -> (i32, i32) {
    %c0_i32 = arith.constant 0 : i32
    %c0_i32_0 = arith.constant 0 : i32
    %c0_i32_1 = arith.constant 0 : i32
    return %c0_i32, %c0_i32_0 : i32, i32
  }
  func.func @transform_5(%arg0: i32) -> (i32, i32) {
    %c0_i32 = arith.constant 0 : i32
    %c0_i32_0 = arith.constant 0 : i32
    %c0_i32_1 = arith.constant 0 : i32
    return %c0_i32, %c0_i32_0 : i32, i32
  }
  func.func @transform_6(%arg0: i32) -> (i32, i32, i32) {
    %c0_i32 = arith.constant 0 : i32
    %c0_i32_0 = arith.constant 0 : i32
    %c0_i32_1 = arith.constant 0 : i32
    return %arg0, %c0_i32, %c0_i32_0 : i32, i32, i32
  }
}

</mosaic_0001>

<llo_original>
// kernel: encoder_forward.1
$region0: #{encoder_forward.1}
  #allocation0 [shape = 'u32[]', space=smem, size = 0x4, offset = 0x4, fixed_abs, tag = 'smem constant byte address 0x4 - core index']
  #allocation1 [shape = 'u32[144,128]{1,0:T(1,128)}', space=vmem, size = 0x12000, scoped, tag = 'internal scratch']
  %s0 = inlined_call_operand.vmem [shape: bf16[2,16,128], index: 0, kind: input, shape index: {}]
  %s1 = inlined_call_operand.vmem [shape: bf16[128,128], index: 1, kind: input, shape index: {}]
  %s2 = inlined_call_operand.hbm [shape: bf16[512,128], index: 2, kind: input, shape index: {}]
  %s3 = inlined_call_operand.vmem [shape: f32[1,128], index: 3, kind: input, shape index: {}]
  %s4 = inlined_call_operand.vmem [shape: bf16[896,128], index: 4, kind: input, shape index: {}]
  %s5 = inlined_call_operand.vmem [shape: f32[1,128], index: 5, kind: input, shape index: {}]
  %s6 = inlined_call_operand.vmem [shape: f32[2,1,128], index: 6, kind: output, shape index: {}]
  %s7 = sld [smem:[#allocation0]]
  $region61: #{encoder_forward.1} parent=0
    _
  %s9 = ssub.s32 1, %s7
  %s10 = scalar_select 0, %s9, %s7
  $region1: #{encoder_forward.1} parent=0
    #allocation2 [shape = 'u8[131072]{0}', space=vmem, size = 0x20000, scoped, tag = 'input window, operand 2, single buffered']
    #allocation3 [shape = 's32[2]{0}', space=sflag, size = 0x8, scoped, tag = 'scoped memory for encoder_forward.1']
    %11 = vsyncpa [#allocation3], 0
    loop: start=0, step=1, limit=4
    $region2: #{encoder_forward.1} parent=1 // loop_pre_header
      _
    $region3: #{encoder_forward.1} parent=1 // loop_header
      %s13 = sphi 0, %s17
      %p14 = scmp.ge.s32.totalorder %s13, 4
      %s23 = sphi 0, %s25
      %s26 = sphi 0, %s23
      %s27 = sphi 0, %s26
      %s43 = sphi 0, %s27
      %s47 = sphi 0, %s47
      %s49 = sphi 0, %s47
      %s50 = sphi 0, %s49
      %s64 = sphi 0, %s50
      %s68 = sphi 0, %s68
      %s70 = sphi 0, %s68
      %s71 = sphi 0, %s70
      %s85 = sphi 0, %s71
      %s89 = sphi 0, %s89
      %s91 = sphi 0, %s89
      %s92 = sphi 0, %s91
      %s106 = sphi 0, %s92
      %s110 = sphi 0, %s110
      %s112 = sphi 0, %s110
      %s113 = sphi 0, %s112
      %s127 = sphi 0, %s113
      %s131 = sphi 0, %s131
      %s133 = sphi 0, %s131
      %s134 = sphi 0, %s133
      %s148 = sphi 0, %s134
      %s154 = sphi 0, %s156
      %s157 = sphi 0, %s154
      %s158 = sphi 0, %s157
      %s174 = sphi 0, %s158
    $region4: #{encoder_forward.1} parent=1 // loop_header_branch
      %16 = sbr.rel (%p14) target = $region8
    $region5: #{encoder_forward.1} parent=1 // loop_body
      %s18 = ssub.s32 %s13, 1
      %s19 = ssub.s32 %s13, 2
      %s20 = sadd.s32 %s13, 1
      %s21 = ssub.s32 %s13, %s20
      %p22 = scmp.eq.s32.totalorder %s21, 0
      %s24 = sadd.s32 %s23, 1
      %s25 = scalar_select %p22, %s23, %s24
      %p28 = pneg %p22
      %p29 = scmp.eq.s32.totalorder %s13, 1
      %p30 = por %p28, %p29
      %p31 = scmp.ne.s32.totalorder %s23, %s26
      %p32 = scmp.eq.s32.totalorder %s13, 0
      %p33 = por %p31, %p32
      %p34 = scmp.ne.s32.totalorder %s23, %s26
      %p35 = scmp.eq.s32.totalorder %s18, 1
      %p36 = por %p34, %p35
      %p37 = scmp.ne.s32.totalorder %s26, %s27
      %p38 = scmp.eq.s32.totalorder %s18, 0
      %p39 = por %p37, %p38
      %p40 = scmp.ne.s32.totalorder %s26, %s27
      %p41 = scmp.eq.s32.totalorder %s19, 1
      %p42 = por %p40, %p41
      %p44 = scmp.ne.s32.totalorder %s27, %s43
      %p45 = scmp.eq.s32.totalorder %s19, 0
      %p46 = por %p44, %p45
      %s48 = sadd.s32 %s47, 1
      %p51 = scmp.eq.s32.totalorder %s13, 1
      %p52 = scmp.ne.s32.totalorder %s47, %s49
      %p53 = scmp.eq.s32.totalorder %s13, 0
      %p54 = por %p52, %p53
      %p55 = scmp.ne.s32.totalorder %s47, %s49
      %p56 = scmp.eq.s32.totalorder %s18, 1
      %p57 = por %p55, %p56
      %p58 = scmp.ne.s32.totalorder %s49, %s50
      %p59 = scmp.eq.s32.totalorder %s18, 0
      %p60 = por %p58, %p59
      %p61 = scmp.ne.s32.totalorder %s49, %s50
      %p62 = scmp.eq.s32.totalorder %s19, 1
      %p63 = por %p61, %p62
      %p65 = scmp.ne.s32.totalorder %s50, %s64
      %p66 = scmp.eq.s32.totalorder %s19, 0
      %p67 = por %p65, %p66
      %s69 = sadd.s32 %s68, 1
      %p72 = scmp.eq.s32.totalorder %s13, 1
      %p73 = scmp.ne.s32.totalorder %s68, %s70
      %p74 = scmp.eq.s32.totalorder %s13, 0
      %p75 = por %p73, %p74
      %p76 = scmp.ne.s32.totalorder %s68, %s70
      %p77 = scmp.eq.s32.totalorder %s18, 1
      %p78 = por %p76, %p77
      %p79 = scmp.ne.s32.totalorder %s70, %s71
      %p80 = scmp.eq.s32.totalorder %s18, 0
      %p81 = por %p79, %p80
      %p82 = scmp.ne.s32.totalorder %s70, %s71
      %p83 = scmp.eq.s32.totalorder %s19, 1
      %p84 = por %p82, %p83
      %p86 = scmp.ne.s32.totalorder %s71, %s85
      %p87 = scmp.eq.s32.totalorder %s19, 0
      %p88 = por %p86, %p87
      %s90 = sadd.s32 %s89, 1
      %p93 = scmp.eq.s32.totalorder %s13, 1
      %p94 = scmp.ne.s32.totalorder %s89, %s91
      %p95 = scmp.eq.s32.totalorder %s13, 0
      %p96 = por %p94, %p95
      %p97 = scmp.ne.s32.totalorder %s89, %s91
      %p98 = scmp.eq.s32.totalorder %s18, 1
      %p99 = por %p97, %p98
      %p100 = scmp.ne.s32.totalorder %s91, %s92
      %p101 = scmp.eq.s32.totalorder %s18, 0
      %p102 = por %p100, %p101
      %p103 = scmp.ne.s32.totalorder %s91, %s92
      %p104 = scmp.eq.s32.totalorder %s19, 1
      %p105 = por %p103, %p104
      %p107 = scmp.ne.s32.totalorder %s92, %s106
      %p108 = scmp.eq.s32.totalorder %s19, 0
      %p109 = por %p107, %p108
      %s111 = sadd.s32 %s110, 1
      %p114 = scmp.eq.s32.totalorder %s13, 1
      %p115 = scmp.ne.s32.totalorder %s110, %s112
      %p116 = scmp.eq.s32.totalorder %s13, 0
      %p117 = por %p115, %p116
      %p118 = scmp.ne.s32.totalorder %s110, %s112
      %p119 = scmp.eq.s32.totalorder %s18, 1
      %p120 = por %p118, %p119
      %p121 = scmp.ne.s32.totalorder %s112, %s113
      %p122 = scmp.eq.s32.totalorder %s18, 0
      %p123 = por %p121, %p122
      %p124 = scmp.ne.s32.totalorder %s112, %s113
      %p125 = scmp.eq.s32.totalorder %s19, 1
      %p126 = por %p124, %p125
      %p128 = scmp.ne.s32.totalorder %s113, %s127
      %p129 = scmp.eq.s32.totalorder %s19, 0
      %p130 = por %p128, %p129
      %s132 = sadd.s32 %s131, 1
      %p135 = scmp.eq.s32.totalorder %s13, 1
      %p136 = scmp.ne.s32.totalorder %s131, %s133
      %p137 = scmp.eq.s32.totalorder %s13, 0
      %p138 = por %p136, %p137
      %p139 = scmp.ne.s32.totalorder %s131, %s133
      %p140 = scmp.eq.s32.totalorder %s18, 1
      %p141 = por %p139, %p140
      %p142 = scmp.ne.s32.totalorder %s133, %s134
      %p143 = scmp.eq.s32.totalorder %s18, 0
      %p144 = por %p142, %p143
      %p145 = scmp.ne.s32.totalorder %s133, %s134
      %p146 = scmp.eq.s32.totalorder %s19, 1
      %p147 = por %p145, %p146
      %p149 = scmp.ne.s32.totalorder %s134, %s148
      %p150 = scmp.eq.s32.totalorder %s19, 0
      %p151 = por %p149, %p150
      %s152 = ssub.s32 %s13, %s20
      %p153 = scmp.eq.s32.totalorder %s152, 0
      %s155 = sadd.s32 %s154, 1
      %s156 = scalar_select %p153, %s154, %s155
      %p159 = pneg %p153
      %p160 = scmp.eq.s32.totalorder %s13, 1
      %p161 = por %p159, %p160
      %p162 = scmp.ne.s32.totalorder %s154, %s157
      %p163 = scmp.eq.s32.totalorder %s13, 0
      %p164 = por %p162, %p163
      %p165 = scmp.ne.s32.totalorder %s154, %s157
      %p166 = scmp.eq.s32.totalorder %s18, 1
      %p167 = por %p165, %p166
      %p168 = scmp.ne.s32.totalorder %s157, %s158
      %p169 = scmp.eq.s32.totalorder %s18, 0
      %p170 = por %p168, %p169
      %p171 = scmp.ne.s32.totalorder %s157, %s158
      %p172 = scmp.eq.s32.totalorder %s19, 1
      %p173 = por %p171, %p172
      %p175 = scmp.ne.s32.totalorder %s158, %s174
      %p176 = scmp.eq.s32.totalorder %s19, 0
      %p177 = por %p175, %p176
      %p178 = scmp.le.s32.totalorder 1, %s13
      %p179 = scmp.lt.s32.totalorder %s13, 3
      %p180 = pnand %p178, %p179
      %p181 = pneg %p180
      // Predicated region
      $region9: #{encoder_forward.1} parent=5 // pred_check
        _
      $region10: #{encoder_forward.1} parent=5 // pred_check_branch
        %183 = sbr.rel (%p180) target = $region12
      $region11: #{encoder_forward.1} parent=5 // pred_region
        %s184 = ssub.s32 %s13, 1
        // Predicated region
        $region13: #{encoder_forward.1} parent=11 // pred_check
          %p185 = pneg %p60
        $region14: #{encoder_forward.1} parent=11 // pred_check_branch
          %187 = sbr.rel (%p185) target = $region16
        $region15: #{encoder_forward.1} parent=11 // pred_region
          _
        $region16: #{encoder_forward.1} parent=11 // pred_fallthru
          _
        // Predicated region
        $region17: #{encoder_forward.1} parent=11 // pred_check
          %p188 = pneg %p81
        $region18: #{encoder_forward.1} parent=11 // pred_check_branch
          %190 = sbr.rel (%p188) target = $region20
        $region19: #{encoder_forward.1} parent=11 // pred_region
          %s192 = ssub.s32 4096, 4096
          %193 = vsyncadd [#allocation3], %s192
          %s194 = sshll.u32 [#allocation2], 4
          %s195 = int_to_ptr.vmem [resolvable:$true] %s194
          %200 = dma.hbm_to_vmem [thread:$0]  %s2, 4096, %s195, [#allocation3], 64, 64, 4
        $region20: #{encoder_forward.1} parent=11 // pred_fallthru
          _
        // Predicated region
        $region21: #{encoder_forward.1} parent=11 // pred_check
          %p201 = pneg %p102
        $region22: #{encoder_forward.1} parent=11 // pred_check_branch
          %203 = sbr.rel (%p201) target = $region24
        $region23: #{encoder_forward.1} parent=11 // pred_region
          _
        $region24: #{encoder_forward.1} parent=11 // pred_fallthru
          _
        // Predicated region
        $region25: #{encoder_forward.1} parent=11 // pred_check
          %p204 = pneg %p123
        $region26: #{encoder_forward.1} parent=11 // pred_check_branch
          %206 = sbr.rel (%p204) target = $region28
        $region27: #{encoder_forward.1} parent=11 // pred_region
          _
        $region28: #{encoder_forward.1} parent=11 // pred_fallthru
          _
        // Predicated region
        $region29: #{encoder_forward.1} parent=11 // pred_check
          %p207 = pneg %p144
        $region30: #{encoder_forward.1} parent=11 // pred_check_branch
          %209 = sbr.rel (%p207) target = $region32
        $region31: #{encoder_forward.1} parent=11 // pred_region
          _
        $region32: #{encoder_forward.1} parent=11 // pred_fallthru
          _
      $region12: #{encoder_forward.1} parent=5 // pred_fallthru
        _
      %p210 = scmp.lt.s32.totalorder %s13, 2
      // Predicated region
      $region33: #{encoder_forward.1} parent=5 // pred_check
        %p211 = pneg %p210
      $region34: #{encoder_forward.1} parent=5 // pred_check_branch
        %213 = sbr.rel (%p211) target = $region36
      $region35: #{encoder_forward.1} parent=5 // pred_region
        // Predicated region
        $region37: #{encoder_forward.1} parent=35 // pred_check
          %p214 = pneg %p33
        $region38: #{encoder_forward.1} parent=35 // pred_check_branch
          %216 = sbr.rel (%p214) target = $region40
        $region39: #{encoder_forward.1} parent=35 // pred_region
          %p217 = scmp.lt.s32.totalorder %s13, 1
          %s218 = scalar_select %p217, %s13, 1
          %s219 = smul.addr %s218, 2
          %s220 = smul.addr %s219, 4
          %s221 = scalar_lea.vmem %s0, %s220
        $region40: #{encoder_forward.1} parent=35 // pred_fallthru
          _
      $region36: #{encoder_forward.1} parent=5 // pred_fallthru
        _
      %p222 = scmp.le.s32.totalorder 1, %s13
      %p223 = scmp.lt.s32.totalorder %s13, 3
      %p224 = pnand %p222, %p223
      %p225 = pneg %p224
      // Predicated region
      $region41: #{encoder_forward.1} parent=5 // pred_check
        _
      $region42: #{encoder_forward.1} parent=5 // pred_check_branch
        %227 = sbr.rel (%p224) target = $region44
      $region43: #{encoder_forward.1} parent=5 // pred_region
        %s228 = ssub.s32 %s13, 1
        // Predicated region
        $region45: #{encoder_forward.1} parent=43 // pred_check
          %p229 = pneg %p81
        $region46: #{encoder_forward.1} parent=43 // pred_check_branch
          %231 = sbr.rel (%p229) target = $region48
        $region47: #{encoder_forward.1} parent=43 // pred_region
          %232 = dma.done [#allocation3], 4096
        $region48: #{encoder_forward.1} parent=43 // pred_fallthru
          _
        %p233 = scmp.lt.s32.totalorder %s18, 1
        %s234 = scalar_select %p233, %s18, 1
        %s235 = smul.addr %s234, 2
        %s236 = smul.addr %s235, 4
        %s237 = scalar_lea.vmem %s0, %s236
        %p238 = pneg %p39
        %p239 = pneg %p36
        %p240 = pneg %p60
        %p241 = pneg %p57
        %p242 = pneg %p81
        %p243 = pneg %p78
        %p244 = pneg %p102
        %p245 = pneg %p99
        %p246 = pneg %p123
        %p247 = pneg %p120
        %p248 = pneg %p144
        %p249 = pneg %p141
        %p250 = pneg %p170
        %p251 = pneg %p167
        %p252 = scmp.lt.s32.totalorder %s18, 1
        %s253 = scalar_select %p252, %s18, 1
        %s254 = scalar_lea.vmem %s6, %s253
        %p255 = scmp.lt.s32.totalorder %s18, 1
        %s256 = scalar_select %p255, %s18, 1
        %s257 = smul.addr %s256, 2
        %s258 = smul.addr %s257, 4
        %s259 = scalar_lea.vmem %s0, %s258
        %p260 = scmp.lt.s32.totalorder %s18, 1
        %s261 = scalar_select %p260, %s18, 1
        %s262 = scalar_lea.vmem %s6, %s261
        %v264 = vld [vmem:[%s259] sm:$0xf]
        %v265 = vld [vmem:[%s259 + $0x4] sm:$0xf]
        %v266 = vld [vmem:[%s1] sm:$0xf]
        %v267 = vld [vmem:[%s1 + $0x4] sm:$0xf]
        %v268 = vld [vmem:[%s1 + $0x8] sm:$0xf]
        %v269 = vld [vmem:[%s1 + $0xc] sm:$0xf]
        %v270 = vld [vmem:[%s1 + $0x10] sm:$0xf]
        %v271 = vld [vmem:[%s1 + $0x14] sm:$0xf]
        %v272 = vld [vmem:[%s1 + $0x18] sm:$0xf]
        %v273 = vld [vmem:[%s1 + $0x1c] sm:$0xf]
        %v274 = vld [vmem:[%s1 + $0x20] sm:$0xf]
        %v275 = vld [vmem:[%s1 + $0x24] sm:$0xf]
        %v276 = vld [vmem:[%s1 + $0x28] sm:$0xf]
        %v277 = vld [vmem:[%s1 + $0x2c] sm:$0xf]
        %v278 = vld [vmem:[%s1 + $0x30] sm:$0xf]
        %v279 = vld [vmem:[%s1 + $0x34] sm:$0xf]
        %v280 = vld [vmem:[%s1 + $0x38] sm:$0xf]
        %v281 = vld [vmem:[%s1 + $0x3c] sm:$0xf]
        %v284 = vunpack.c.l.b16 %v264
        %v285 = vunpack.c.l.b16 %v265
        %v286 = vpack.c.b16 %v285, %v284
        %v304 = vunpack.c.l.b16 %v266
        %v305 = vunpack.c.l.b16 %v267
        %v306 = vunpack.c.l.b16 %v268
        %v307 = vunpack.c.l.b16 %v269
        %v308 = vunpack.c.l.b16 %v270
        %v309 = vunpack.c.l.b16 %v271
        %v310 = vunpack.c.l.b16 %v272
        %v311 = vunpack.c.l.b16 %v273
        %v312 = vunpack.c.l.b16 %v274
        %v313 = vunpack.c.l.b16 %v275
        %v314 = vunpack.c.l.b16 %v276
        %v315 = vunpack.c.l.b16 %v277
        %v316 = vunpack.c.l.b16 %v278
        %v317 = vunpack.c.l.b16 %v279
        %v318 = vunpack.c.l.b16 %v280
        %v319 = vunpack.c.l.b16 %v281
        %v320 = vpack.c.b16 %v305, %v304
        %v321 = vpack.c.b16 %v307, %v306
        %v322 = vpack.c.b16 %v309, %v308
        %v323 = vpack.c.b16 %v311, %v310
        %v324 = vpack.c.b16 %v313, %v312
        %v325 = vpack.c.b16 %v315, %v314
        %v326 = vpack.c.b16 %v317, %v316
        %v327 = vpack.c.b16 %v319, %v318
        %336 = vmatprep.subr.bf16.mxu0 0
        %337 = vmatpush1.bf16.msra.mxu0 %v320
        %338 = vmatprep.subr.bf16.mxu0 0
        %339 = vmatpush1.bf16.msra.mxu0 %v321
        %340 = vmatprep.subr.bf16.mxu0 0
        %341 = vmatpush1.bf16.msra.mxu0 %v322
        %342 = vmatprep.subr.bf16.mxu0 0
        %343 = vmatpush1.bf16.msra.mxu0 %v323
        %344 = vmatprep.subr.bf16.mxu0 0
        %345 = vmatpush1.bf16.msra.mxu0 %v324
        %346 = vmatprep.subr.bf16.mxu0 0
        %347 = vmatpush1.bf16.msra.mxu0 %v325
        %348 = vmatprep.subr.bf16.mxu0 0
        %349 = vmatpush1.bf16.msra.mxu0 %v326
        %350 = vmatprep.subr.bf16.mxu0 0
        %351 = vmatpush1.bf16.msra.mxu0 %v327
        %352 = vmatprep.subr.bf16.mxu0 0
        %353 = vmatpush1.bf16.msra.mxu0 0
        %354 = vmatprep.subr.bf16.mxu0 0
        %355 = vmatpush1.bf16.msra.mxu0 0
        %356 = vmatprep.subr.bf16.mxu0 0
        %357 = vmatpush1.bf16.msra.mxu0 0
        %358 = vmatprep.subr.bf16.mxu0 0
        %359 = vmatpush1.bf16.msra.mxu0 0
        %360 = vmatprep.subr.bf16.mxu0 0
        %361 = vmatpush1.bf16.msra.mxu0 0
        %362 = vmatprep.subr.bf16.mxu0 0
        %363 = vmatpush1.bf16.msra.mxu0 0
        %364 = vmatprep.subr.bf16.mxu0 0
        %365 = vmatpush1.bf16.msra.mxu0 0
        %366 = vmatprep.subr.bf16.mxu0 0
        %367 = vmatpush1.bf16.msra.mxu0 0
        %368 = vmatprep.mubr.bf16.mxu0 0
        %369 = vmatmul.mubr.bf16.gmra.mrb[0].mxu0 %v286
        %v370 = vpop.f32.mrb[0].mxu0
        %v371 = vadd.f32 0.0, %v370
        %v372 = vpop.f32.mrb[0].mxu0
        %v373 = vpop.f32.mrb[0].mxu0
        %v374 = vadd.f32 0.0, %v373
        %v375 = vpop.f32.mrb[0].mxu0
        %376 = vdwg.mxu0
        %v377 = vmax.f32 %v371, 0.0
        %v378 = vmax.f32 %v374, 0.0
        %v380 = vrot.slane %v377, 1
        %v383 = vrot.slane %v378, 1
        %v385 = vpack.c.bf16 %v377, %v377
        %v386 = vpack.c.bf16 %v378, %v378
        %v387 = vpack.c.bf16 %v380, %v380
        %v388 = vpack.c.bf16 %v383, %v383
        %v389 = vld [vmem:[#allocation2] sm:$0xf]
        %v390 = vld [vmem:[#allocation2 + $0x4] sm:$0xf]
        %v391 = vld [vmem:[#allocation2 + $0x8] sm:$0xf]
        %v392 = vld [vmem:[#allocation2 + $0xc] sm:$0xf]
        %v393 = vld [vmem:[#allocation2 + $0x10] sm:$0xf]
        %v394 = vld [vmem:[#allocation2 + $0x14] sm:$0xf]
        %v395 = vld [vmem:[#allocation2 + $0x18] sm:$0xf]
        %v396 = vld [vmem:[#allocation2 + $0x1c] sm:$0xf]
        %v397 = vld [vmem:[#allocation2 + $0x20] sm:$0xf]
        %v398 = vld [vmem:[#allocation2 + $0x24] sm:$0xf]
        %v399 = vld [vmem:[#allocation2 + $0x28] sm:$0xf]
        %v400 = vld [vmem:[#allocation2 + $0x2c] sm:$0xf]
        %v401 = vld [vmem:[#allocation2 + $0x30] sm:$0xf]
        %v402 = vld [vmem:[#allocation2 + $0x34] sm:$0xf]
        %v403 = vld [vmem:[#allocation2 + $0x38] sm:$0xf]
        %v404 = vld [vmem:[#allocation2 + $0x3c] sm:$0xf]
        %v405 = vld [vmem:[#allocation2 + $0x40] sm:$0xf]
        %v406 = vld [vmem:[#allocation2 + $0x44] sm:$0xf]
        %v407 = vld [vmem:[#allocation2 + $0x48] sm:$0xf]
        %v408 = vld [vmem:[#allocation2 + $0x4c] sm:$0xf]
        %v409 = vld [vmem:[#allocation2 + $0x50] sm:$0xf]
        %v410 = vld [vmem:[#allocation2 + $0x54] sm:$0xf]
        %v411 = vld [vmem:[#allocation2 + $0x58] sm:$0xf]
        %v412 = vld [vmem:[#allocation2 + $0x5c] sm:$0xf]
        %v413 = vld [vmem:[#allocation2 + $0x60] sm:$0xf]
        %v414 = vld [vmem:[#allocation2 + $0x64] sm:$0xf]
        %v415 = vld [vmem:[#allocation2 + $0x68] sm:$0xf]
        %v416 = vld [vmem:[#allocation2 + $0x6c] sm:$0xf]
        %v417 = vld [vmem:[#allocation2 + $0x70] sm:$0xf]
        %v418 = vld [vmem:[#allocation2 + $0x74] sm:$0xf]
        %v419 = vld [vmem:[#allocation2 + $0x78] sm:$0xf]
        %v420 = vld [vmem:[#allocation2 + $0x7c] sm:$0xf]
        %v421 = vld [vmem:[#allocation2 + $0x80] sm:$0xf]
        %v422 = vld [vmem:[#allocation2 + $0x84] sm:$0xf]
        %v423 = vld [vmem:[#allocation2 + $0x88] sm:$0xf]
        %v424 = vld [vmem:[#allocation2 + $0x8c] sm:$0xf]
        %v425 = vld [vmem:[#allocation2 + $0x90] sm:$0xf]
        %v426 = vld [vmem:[#allocation2 + $0x94] sm:$0xf]
        %v427 = vld [vmem:[#allocation2 + $0x98] sm:$0xf]
        %v428 = vld [vmem:[#allocation2 + $0x9c] sm:$0xf]
        %v429 = vld [vmem:[#allocation2 + $0xa0] sm:$0xf]
        %v430 = vld [vmem:[#allocation2 + $0xa4] sm:$0xf]
        %v431 = vld [vmem:[#allocation2 + $0xa8] sm:$0xf]
        %v432 = vld [vmem:[#allocation2 + $0xac] sm:$0xf]
        %v433 = vld [vmem:[#allocation2 + $0xb0] sm:$0xf]
        %v434 = vld [vmem:[#allocation2 + $0xb4] sm:$0xf]
        %v435 = vld [vmem:[#allocation2 + $0xb8] sm:$0xf]
        %v436 = vld [vmem:[#allocation2 + $0xbc] sm:$0xf]
        %v437 = vld [vmem:[#allocation2 + $0xc0] sm:$0xf]
        %v438 = vld [vmem:[#allocation2 + $0xc4] sm:$0xf]
        %v439 = vld [vmem:[#allocation2 + $0xc8] sm:$0xf]
        %v440 = vld [vmem:[#allocation2 + $0xcc] sm:$0xf]
        %v441 = vld [vmem:[#allocation2 + $0xd0] sm:$0xf]
        %v442 = vld [vmem:[#allocation2 + $0xd4] sm:$0xf]
        %v443 = vld [vmem:[#allocation2 + $0xd8] sm:$0xf]
        %v444 = vld [vmem:[#allocation2 + $0xdc] sm:$0xf]
        %v445 = vld [vmem:[#allocation2 + $0xe0] sm:$0xf]
        %v446 = vld [vmem:[#allocation2 + $0xe4] sm:$0xf]
        %v447 = vld [vmem:[#allocation2 + $0xe8] sm:$0xf]
        %v448 = vld [vmem:[#allocation2 + $0xec] sm:$0xf]
        %v449 = vld [vmem:[#allocation2 + $0xf0] sm:$0xf]
        %v450 = vld [vmem:[#allocation2 + $0xf4] sm:$0xf]
        %v451 = vld [vmem:[#allocation2 + $0xf8] sm:$0xf]
        %v452 = vld [vmem:[#allocation2 + $0xfc] sm:$0xf]
        %v453 = vld [vmem:[%s3] sm:$0x1]
        %v455 = vlaneseq
        %v456 = vshrl.u32 %v455, 7
        %v457 = vsub.s32 0, %v456
        %v458 = vrot.slane %v453, %v457
        %v524 = vunpack.c.l.b16 %v389
        %v525 = vunpack.c.l.b16 %v390
        %v526 = vunpack.c.l.b16 %v391
        %v527 = vunpack.c.l.b16 %v392
        %v528 = vunpack.c.l.b16 %v393
        %v529 = vunpack.c.l.b16 %v394
        %v530 = vunpack.c.l.b16 %v395
        %v531 = vunpack.c.l.b16 %v396
        %v532 = vunpack.c.l.b16 %v397
        %v533 = vunpack.c.l.b16 %v398
        %v534 = vunpack.c.l.b16 %v399
        %v535 = vunpack.c.l.b16 %v400
        %v536 = vunpack.c.l.b16 %v401
        %v537 = vunpack.c.l.b16 %v402
        %v538 = vunpack.c.l.b16 %v403
        %v539 = vunpack.c.l.b16 %v404
        %v540 = vunpack.c.l.b16 %v405
        %v541 = vunpack.c.l.b16 %v406
        %v542 = vunpack.c.l.b16 %v407
        %v543 = vunpack.c.l.b16 %v408
        %v544 = vunpack.c.l.b16 %v409
        %v545 = vunpack.c.l.b16 %v410
        %v546 = vunpack.c.l.b16 %v411
        %v547 = vunpack.c.l.b16 %v412
        %v548 = vunpack.c.l.b16 %v413
        %v549 = vunpack.c.l.b16 %v414
        %v550 = vunpack.c.l.b16 %v415
        %v551 = vunpack.c.l.b16 %v416
        %v552 = vunpack.c.l.b16 %v417
        %v553 = vunpack.c.l.b16 %v418
        %v554 = vunpack.c.l.b16 %v419
        %v555 = vunpack.c.l.b16 %v420
        %v556 = vunpack.c.l.b16 %v421
        %v557 = vunpack.c.l.b16 %v422
        %v558 = vunpack.c.l.b16 %v423
        %v559 = vunpack.c.l.b16 %v424
        %v560 = vunpack.c.l.b16 %v425
        %v561 = vunpack.c.l.b16 %v426
        %v562 = vunpack.c.l.b16 %v427
        %v563 = vunpack.c.l.b16 %v428
        %v564 = vunpack.c.l.b16 %v429
        %v565 = vunpack.c.l.b16 %v430
        %v566 = vunpack.c.l.b16 %v431
        %v567 = vunpack.c.l.b16 %v432
        %v568 = vunpack.c.l.b16 %v433
        %v569 = vunpack.c.l.b16 %v434
        %v570 = vunpack.c.l.b16 %v435
        %v571 = vunpack.c.l.b16 %v436
        %v572 = vunpack.c.l.b16 %v437
        %v573 = vunpack.c.l.b16 %v438
        %v574 = vunpack.c.l.b16 %v439
        %v575 = vunpack.c.l.b16 %v440
        %v576 = vunpack.c.l.b16 %v441
        %v577 = vunpack.c.l.b16 %v442
        %v578 = vunpack.c.l.b16 %v443
        %v579 = vunpack.c.l.b16 %v444
        %v580 = vunpack.c.l.b16 %v445
        %v581 = vunpack.c.l.b16 %v446
        %v582 = vunpack.c.l.b16 %v447
        %v583 = vunpack.c.l.b16 %v448
        %v584 = vunpack.c.l.b16 %v449
        %v585 = vunpack.c.l.b16 %v450
        %v586 = vunpack.c.l.b16 %v451
        %v587 = vunpack.c.l.b16 %v452
        %v588 = vpack.c.b16 %v525, %v524
        %v589 = vpack.c.b16 %v527, %v526
        %v590 = vpack.c.b16 %v529, %v528
        %v591 = vpack.c.b16 %v531, %v530
        %v592 = vpack.c.b16 %v533, %v532
        %v593 = vpack.c.b16 %v535, %v534
        %v594 = vpack.c.b16 %v537, %v536
        %v595 = vpack.c.b16 %v539, %v538
        %v596 = vpack.c.b16 %v541, %v540
        %v597 = vpack.c.b16 %v543, %v542
        %v598 = vpack.c.b16 %v545, %v544
        %v599 = vpack.c.b16 %v547, %v546
        %v600 = vpack.c.b16 %v549, %v548
        %v601 = vpack.c.b16 %v551, %v550
        %v602 = vpack.c.b16 %v553, %v552
        %v603 = vpack.c.b16 %v555, %v554
        %v604 = vpack.c.b16 %v557, %v556
        %v605 = vpack.c.b16 %v559, %v558
        %v606 = vpack.c.b16 %v561, %v560
        %v607 = vpack.c.b16 %v563, %v562
        %v608 = vpack.c.b16 %v565, %v564
        %v609 = vpack.c.b16 %v567, %v566
        %v610 = vpack.c.b16 %v569, %v568
        %v611 = vpack.c.b16 %v571, %v570
        %v612 = vpack.c.b16 %v573, %v572
        %v613 = vpack.c.b16 %v575, %v574
        %v614 = vpack.c.b16 %v577, %v576
        %v615 = vpack.c.b16 %v579, %v578
        %v616 = vpack.c.b16 %v581, %v580
        %v617 = vpack.c.b16 %v583, %v582
        %v618 = vpack.c.b16 %v585, %v584
        %v619 = vpack.c.b16 %v587, %v586
        %652 = vmatprep.subr.bf16.mxu0 0
        %653 = vmatpush1.bf16.msra.mxu0 %v588
        %654 = vmatprep.subr.bf16.mxu0 0
        %655 = vmatpush1.bf16.msra.mxu0 %v589
        %656 = vmatprep.subr.bf16.mxu0 0
        %657 = vmatpush1.bf16.msra.mxu0 %v590
        %658 = vmatprep.subr.bf16.mxu0 0
        %659 = vmatpush1.bf16.msra.mxu0 %v591
        %660 = vmatprep.subr.bf16.mxu0 0
        %661 = vmatpush1.bf16.msra.mxu0 %v592
        %662 = vmatprep.subr.bf16.mxu0 0
        %663 = vmatpush1.bf16.msra.mxu0 %v593
        %664 = vmatprep.subr.bf16.mxu0 0
        %665 = vmatpush1.bf16.msra.mxu0 %v594
        %666 = vmatprep.subr.bf16.mxu0 0
        %667 = vmatpush1.bf16.msra.mxu0 %v595
        %668 = vmatprep.subr.bf16.mxu0 0
        %669 = vmatpush1.bf16.msra.mxu0 %v596
        %670 = vmatprep.subr.bf16.mxu0 0
        %671 = vmatpush1.bf16.msra.mxu0 %v597
        %672 = vmatprep.subr.bf16.mxu0 0
        %673 = vmatpush1.bf16.msra.mxu0 %v598
        %674 = vmatprep.subr.bf16.mxu0 0
        %675 = vmatpush1.bf16.msra.mxu0 %v599
        %676 = vmatprep.subr.bf16.mxu0 0
        %677 = vmatpush1.bf16.msra.mxu0 %v600
        %678 = vmatprep.subr.bf16.mxu0 0
        %679 = vmatpush1.bf16.msra.mxu0 %v601
        %680 = vmatprep.subr.bf16.mxu0 0
        %681 = vmatpush1.bf16.msra.mxu0 %v602
        %682 = vmatprep.subr.bf16.mxu0 0
        %683 = vmatpush1.bf16.msra.mxu0 %v603
        %684 = vmatprep.mubr.bf16.mxu0 %v386
        %685 = vmatmul.mubr.bf16.gmra.mrb[0].mxu0 %v385
        %v686 = vpop.f32.mrb[0].mxu0
        %v687 = vadd.f32 %v458, %v686
        %v688 = vpop.f32.mrb[0].mxu0
        %v689 = vpop.f32.mrb[0].mxu0
        %v690 = vpop.f32.mrb[0].mxu0
        %691 = vdwg.mxu0
        %692 = vmatprep.subr.bf16.mxu0 0
        %693 = vmatpush1.bf16.msra.mxu0 %v604
        %694 = vmatprep.subr.bf16.mxu0 0
        %695 = vmatpush1.bf16.msra.mxu0 %v605
        %696 = vmatprep.subr.bf16.mxu0 0
        %697 = vmatpush1.bf16.msra.mxu0 %v606
        %698 = vmatprep.subr.bf16.mxu0 0
        %699 = vmatpush1.bf16.msra.mxu0 %v607
        %700 = vmatprep.subr.bf16.mxu0 0
        %701 = vmatpush1.bf16.msra.mxu0 %v608
        %702 = vmatprep.subr.bf16.mxu0 0
        %703 = vmatpush1.bf16.msra.mxu0 %v609
        %704 = vmatprep.subr.bf16.mxu0 0
        %705 = vmatpush1.bf16.msra.mxu0 %v610
        %706 = vmatprep.subr.bf16.mxu0 0
        %707 = vmatpush1.bf16.msra.mxu0 %v611
        %708 = vmatprep.subr.bf16.mxu0 0
        %709 = vmatpush1.bf16.msra.mxu0 %v612
        %710 = vmatprep.subr.bf16.mxu0 0
        %711 = vmatpush1.bf16.msra.mxu0 %v613
        %712 = vmatprep.subr.bf16.mxu0 0
        %713 = vmatpush1.bf16.msra.mxu0 %v614
        %714 = vmatprep.subr.bf16.mxu0 0
        %715 = vmatpush1.bf16.msra.mxu0 %v615
        %716 = vmatprep.subr.bf16.mxu0 0
        %717 = vmatpush1.bf16.msra.mxu0 %v616
        %718 = vmatprep.subr.bf16.mxu0 0
        %719 = vmatpush1.bf16.msra.mxu0 %v617
        %720 = vmatprep.subr.bf16.mxu0 0
        %721 = vmatpush1.bf16.msra.mxu0 %v618
        %722 = vmatprep.subr.bf16.mxu0 0
        %723 = vmatpush1.bf16.msra.mxu0 %v619
        %724 = vmatprep.mubr.bf16.mxu0 %v388
        %725 = vmatmul.mubr.bf16.gmra.mrb[0].mxu0 %v387
        %v726 = vpop.f32.mrb[0].mxu0
        %v727 = vadd.f32 %v687, %v726
        %v728 = vpop.f32.mrb[0].mxu0
        %v729 = vpop.f32.mrb[0].mxu0
        %v730 = vpop.f32.mrb[0].mxu0
        %731 = vdwg.mxu0
        %v732 = vmax.f32 %v727, 0.0
        %v734 = vrot.slane %v732, 1
        %v736 = vrot.slane %v732, 2
        %v738 = vrot.slane %v732, 3
        %v740 = vrot.slane %v732, 4
        %v742 = vrot.slane %v732, 5
        %v744 = vrot.slane %v732, 6
        %v746 = vpack.c.bf16 %v732, %v732
        %v747 = vpack.c.bf16 %v734, %v734
        %v748 = vpack.c.bf16 %v736, %v736
        %v749 = vpack.c.bf16 %v738, %v738
        %v750 = vpack.c.bf16 %v740, %v740
        %v751 = vpack.c.bf16 %v742, %v742
        %v752 = vpack.c.bf16 %v744, %v744
        %v753 = vld [vmem:[%s4] sm:$0xf]
        %v754 = vld [vmem:[%s4 + $0x4] sm:$0xf]
        %v755 = vld [vmem:[%s4 + $0x8] sm:$0xf]
        %v756 = vld [vmem:[%s4 + $0xc] sm:$0xf]
        %v757 = vld [vmem:[%s4 + $0x10] sm:$0xf]
        %v758 = vld [vmem:[%s4 + $0x14] sm:$0xf]
        %v759 = vld [vmem:[%s4 + $0x18] sm:$0xf]
        %v760 = vld [vmem:[%s4 + $0x1c] sm:$0xf]
        %v761 = vld [vmem:[%s4 + $0x20] sm:$0xf]
        %v762 = vld [vmem:[%s4 + $0x24] sm:$0xf]
        %v763 = vld [vmem:[%s4 + $0x28] sm:$0xf]
        %v764 = vld [vmem:[%s4 + $0x2c] sm:$0xf]
        %v765 = vld [vmem:[%s4 + $0x30] sm:$0xf]
        %v766 = vld [vmem:[%s4 + $0x34] sm:$0xf]
        %v767 = vld [vmem:[%s4 + $0x38] sm:$0xf]
        %v768 = vld [vmem:[%s4 + $0x3c] sm:$0xf]
        %v769 = vld [vmem:[%s4 + $0x40] sm:$0xf]
        %v770 = vld [vmem:[%s4 + $0x44] sm:$0xf]
        %v771 = vld [vmem:[%s4 + $0x48] sm:$0xf]
        %v772 = vld [vmem:[%s4 + $0x4c] sm:$0xf]
        %v773 = vld [vmem:[%s4 + $0x50] sm:$0xf]
        %v774 = vld [vmem:[%s4 + $0x54] sm:$0xf]
        %v775 = vld [vmem:[%s4 + $0x58] sm:$0xf]
        %v776 = vld [vmem:[%s4 + $0x5c] sm:$0xf]
        %v777 = vld [vmem:[%s4 + $0x60] sm:$0xf]
        %v778 = vld [vmem:[%s4 + $0x64] sm:$0xf]
        %v779 = vld [vmem:[%s4 + $0x68] sm:$0xf]
        %v780 = vld [vmem:[%s4 + $0x6c] sm:$0xf]
        %v781 = vld [vmem:[%s4 + $0x70] sm:$0xf]
        %v782 = vld [vmem:[%s4 + $0x74] sm:$0xf]
        %v783 = vld [vmem:[%s4 + $0x78] sm:$0xf]
        %v784 = vld [vmem:[%s4 + $0x7c] sm:$0xf]
        %v785 = vld [vmem:[%s4 + $0x80] sm:$0xf]
        %v786 = vld [vmem:[%s4 + $0x84] sm:$0xf]
        %v787 = vld [vmem:[%s4 + $0x88] sm:$0xf]
        %v788 = vld [vmem:[%s4 + $0x8c] sm:$0xf]
        %v789 = vld [vmem:[%s4 + $0x90] sm:$0xf]
        %v790 = vld [vmem:[%s4 + $0x94] sm:$0xf]
        %v791 = vld [vmem:[%s4 + $0x98] sm:$0xf]
        %v792 = vld [vmem:[%s4 + $0x9c] sm:$0xf]
        %v793 = vld [vmem:[%s4 + $0xa0] sm:$0xf]
        %v794 = vld [vmem:[%s4 + $0xa4] sm:$0xf]
        %v795 = vld [vmem:[%s4 + $0xa8] sm:$0xf]
        %v796 = vld [vmem:[%s4 + $0xac] sm:$0xf]
        %v797 = vld [vmem:[%s4 + $0xb0] sm:$0xf]
        %v798 = vld [vmem:[%s4 + $0xb4] sm:$0xf]
        %v799 = vld [vmem:[%s4 + $0xb8] sm:$0xf]
        %v800 = vld [vmem:[%s4 + $0xbc] sm:$0xf]
        %v801 = vld [vmem:[%s4 + $0xc0] sm:$0xf]
        %v802 = vld [vmem:[%s4 + $0xc4] sm:$0xf]
        %v803 = vld [vmem:[%s4 + $0xc8] sm:$0xf]
        %v804 = vld [vmem:[%s4 + $0xcc] sm:$0xf]
        %v805 = vld [vmem:[%s4 + $0xd0] sm:$0xf]
        %v806 = vld [vmem:[%s4 + $0xd4] sm:$0xf]
        %v807 = vld [vmem:[%s4 + $0xd8] sm:$0xf]
        %v808 = vld [vmem:[%s4 + $0xdc] sm:$0xf]
        %v809 = vld [vmem:[%s4 + $0xe0] sm:$0xf]
        %v810 = vld [vmem:[%s4 + $0xe4] sm:$0xf]
        %v811 = vld [vmem:[%s4 + $0xe8] sm:$0xf]
        %v812 = vld [vmem:[%s4 + $0xec] sm:$0xf]
        %v813 = vld [vmem:[%s4 + $0xf0] sm:$0xf]
        %v814 = vld [vmem:[%s4 + $0xf4] sm:$0xf]
        %v815 = vld [vmem:[%s4 + $0xf8] sm:$0xf]
        %v816 = vld [vmem:[%s4 + $0xfc] sm:$0xf]
        %v817 = vld [vmem:[%s4 + $0x100] sm:$0xf]
        %v818 = vld [vmem:[%s4 + $0x104] sm:$0xf]
        %v819 = vld [vmem:[%s4 + $0x108] sm:$0xf]
        %v820 = vld [vmem:[%s4 + $0x10c] sm:$0xf]
        %v821 = vld [vmem:[%s4 + $0x110] sm:$0xf]
        %v822 = vld [vmem:[%s4 + $0x114] sm:$0xf]
        %v823 = vld [vmem:[%s4 + $0x118] sm:$0xf]
        %v824 = vld [vmem:[%s4 + $0x11c] sm:$0xf]
        %v825 = vld [vmem:[%s4 + $0x120] sm:$0xf]
        %v826 = vld [vmem:[%s4 + $0x124] sm:$0xf]
        %v827 = vld [vmem:[%s4 + $0x128] sm:$0xf]
        %v828 = vld [vmem:[%s4 + $0x12c] sm:$0xf]
        %v829 = vld [vmem:[%s4 + $0x130] sm:$0xf]
        %v830 = vld [vmem:[%s4 + $0x134] sm:$0xf]
        %v831 = vld [vmem:[%s4 + $0x138] sm:$0xf]
        %v832 = vld [vmem:[%s4 + $0x13c] sm:$0xf]
        %v833 = vld [vmem:[%s4 + $0x140] sm:$0xf]
        %v834 = vld [vmem:[%s4 + $0x144] sm:$0xf]
        %v835 = vld [vmem:[%s4 + $0x148] sm:$0xf]
        %v836 = vld [vmem:[%s4 + $0x14c] sm:$0xf]
        %v837 = vld [vmem:[%s4 + $0x150] sm:$0xf]
        %v838 = vld [vmem:[%s4 + $0x154] sm:$0xf]
        %v839 = vld [vmem:[%s4 + $0x158] sm:$0xf]
        %v840 = vld [vmem:[%s4 + $0x15c] sm:$0xf]
        %v841 = vld [vmem:[%s4 + $0x160] sm:$0xf]
        %v842 = vld [vmem:[%s4 + $0x164] sm:$0xf]
        %v843 = vld [vmem:[%s4 + $0x168] sm:$0xf]
        %v844 = vld [vmem:[%s4 + $0x16c] sm:$0xf]
        %v845 = vld [vmem:[%s4 + $0x170] sm:$0xf]
        %v846 = vld [vmem:[%s4 + $0x174] sm:$0xf]
        %v847 = vld [vmem:[%s4 + $0x178] sm:$0xf]
        %v848 = vld [vmem:[%s4 + $0x17c] sm:$0xf]
        %v849 = vld [vmem:[%s4 + $0x180] sm:$0xf]
        %v850 = vld [vmem:[%s4 + $0x184] sm:$0xf]
        %v851 = vld [vmem:[%s4 + $0x188] sm:$0xf]
        %v852 = vld [vmem:[%s4 + $0x18c] sm:$0xf]
        %v853 = vld [vmem:[%s4 + $0x190] sm:$0xf]
        %v854 = vld [vmem:[%s4 + $0x194] sm:$0xf]
        %v855 = vld [vmem:[%s4 + $0x198] sm:$0xf]
        %v856 = vld [vmem:[%s4 + $0x19c] sm:$0xf]
        %v857 = vld [vmem:[%s4 + $0x1a0] sm:$0xf]
        %v858 = vld [vmem:[%s4 + $0x1a4] sm:$0xf]
        %v859 = vld [vmem:[%s4 + $0x1a8] sm:$0xf]
        %v860 = vld [vmem:[%s4 + $0x1ac] sm:$0xf]
        %v861 = vld [vmem:[%s4 + $0x1b0] sm:$0xf]
        %v862 = vld [vmem:[%s4 + $0x1b4] sm:$0xf]
        %v863 = vld [vmem:[%s4 + $0x1b8] sm:$0xf]
        %v864 = vld [vmem:[%s4 + $0x1bc] sm:$0xf]
        %v865 = vld [vmem:[%s5] sm:$0x1]
        %v978 = vunpack.c.l.b16 %v753
        %v979 = vunpack.c.l.b16 %v754
        %v980 = vunpack.c.l.b16 %v755
        %v981 = vunpack.c.l.b16 %v756
        %v982 = vunpack.c.l.b16 %v757
        %v983 = vunpack.c.l.b16 %v758
        %v984 = vunpack.c.l.b16 %v759
        %v985 = vunpack.c.l.b16 %v760
        %v986 = vunpack.c.l.b16 %v761
        %v987 = vunpack.c.l.b16 %v762
        %v988 = vunpack.c.l.b16 %v763
        %v989 = vunpack.c.l.b16 %v764
        %v990 = vunpack.c.l.b16 %v765
        %v991 = vunpack.c.l.b16 %v766
        %v992 = vunpack.c.l.b16 %v767
        %v993 = vunpack.c.l.b16 %v768
        %v994 = vunpack.c.l.b16 %v769
        %v995 = vunpack.c.l.b16 %v770
        %v996 = vunpack.c.l.b16 %v771
        %v997 = vunpack.c.l.b16 %v772
        %v998 = vunpack.c.l.b16 %v773
        %v999 = vunpack.c.l.b16 %v774
        %v1000 = vunpack.c.l.b16 %v775
        %v1001 = vunpack.c.l.b16 %v776
        %v1002 = vunpack.c.l.b16 %v777
        %v1003 = vunpack.c.l.b16 %v778
        %v1004 = vunpack.c.l.b16 %v779
        %v1005 = vunpack.c.l.b16 %v780
        %v1006 = vunpack.c.l.b16 %v781
        %v1007 = vunpack.c.l.b16 %v782
        %v1008 = vunpack.c.l.b16 %v783
        %v1009 = vunpack.c.l.b16 %v784
        %v1010 = vunpack.c.l.b16 %v785
        %v1011 = vunpack.c.l.b16 %v786
        %v1012 = vunpack.c.l.b16 %v787
        %v1013 = vunpack.c.l.b16 %v788
        %v1014 = vunpack.c.l.b16 %v789
        %v1015 = vunpack.c.l.b16 %v790
        %v1016 = vunpack.c.l.b16 %v791
        %v1017 = vunpack.c.l.b16 %v792
        %v1018 = vunpack.c.l.b16 %v793
        %v1019 = vunpack.c.l.b16 %v794
        %v1020 = vunpack.c.l.b16 %v795
        %v1021 = vunpack.c.l.b16 %v796
        %v1022 = vunpack.c.l.b16 %v797
        %v1023 = vunpack.c.l.b16 %v798
        %v1024 = vunpack.c.l.b16 %v799
        %v1025 = vunpack.c.l.b16 %v800
        %v1026 = vunpack.c.l.b16 %v801
        %v1027 = vunpack.c.l.b16 %v802
        %v1028 = vunpack.c.l.b16 %v803
        %v1029 = vunpack.c.l.b16 %v804
        %v1030 = vunpack.c.l.b16 %v805
        %v1031 = vunpack.c.l.b16 %v806
        %v1032 = vunpack.c.l.b16 %v807
        %v1033 = vunpack.c.l.b16 %v808
        %v1034 = vunpack.c.l.b16 %v809
        %v1035 = vunpack.c.l.b16 %v810
        %v1036 = vunpack.c.l.b16 %v811
        %v1037 = vunpack.c.l.b16 %v812
        %v1038 = vunpack.c.l.b16 %v813
        %v1039 = vunpack.c.l.b16 %v814
        %v1040 = vunpack.c.l.b16 %v815
        %v1041 = vunpack.c.l.b16 %v816
        %v1042 = vunpack.c.l.b16 %v817
        %v1043 = vunpack.c.l.b16 %v818
        %v1044 = vunpack.c.l.b16 %v819
        %v1045 = vunpack.c.l.b16 %v820
        %v1046 = vunpack.c.l.b16 %v821
        %v1047 = vunpack.c.l.b16 %v822
        %v1048 = vunpack.c.l.b16 %v823
        %v1049 = vunpack.c.l.b16 %v824
        %v1050 = vunpack.c.l.b16 %v825
        %v1051 = vunpack.c.l.b16 %v826
        %v1052 = vunpack.c.l.b16 %v827
        %v1053 = vunpack.c.l.b16 %v828
        %v1054 = vunpack.c.l.b16 %v829
        %v1055 = vunpack.c.l.b16 %v830
        %v1056 = vunpack.c.l.b16 %v831
        %v1057 = vunpack.c.l.b16 %v832
        %v1058 = vunpack.c.l.b16 %v833
        %v1059 = vunpack.c.l.b16 %v834
        %v1060 = vunpack.c.l.b16 %v835
        %v1061 = vunpack.c.l.b16 %v836
        %v1062 = vunpack.c.l.b16 %v837
        %v1063 = vunpack.c.l.b16 %v838
        %v1064 = vunpack.c.l.b16 %v839
        %v1065 = vunpack.c.l.b16 %v840
        %v1066 = vunpack.c.l.b16 %v841
        %v1067 = vunpack.c.l.b16 %v842
        %v1068 = vunpack.c.l.b16 %v843
        %v1069 = vunpack.c.l.b16 %v844
        %v1070 = vunpack.c.l.b16 %v845
        %v1071 = vunpack.c.l.b16 %v846
        %v1072 = vunpack.c.l.b16 %v847
        %v1073 = vunpack.c.l.b16 %v848
        %v1074 = vunpack.c.l.b16 %v849
        %v1075 = vunpack.c.l.b16 %v850
        %v1076 = vunpack.c.l.b16 %v851
        %v1077 = vunpack.c.l.b16 %v852
        %v1078 = vunpack.c.l.b16 %v853
        %v1079 = vunpack.c.l.b16 %v854
        %v1080 = vunpack.c.l.b16 %v855
        %v1081 = vunpack.c.l.b16 %v856
        %v1082 = vunpack.c.l.b16 %v857
        %v1083 = vunpack.c.l.b16 %v858
        %v1084 = vunpack.c.l.b16 %v859
        %v1085 = vunpack.c.l.b16 %v860
        %v1086 = vunpack.c.l.b16 %v861
        %v1087 = vunpack.c.l.b16 %v862
        %v1088 = vunpack.c.l.b16 %v863
        %v1089 = vunpack.c.l.b16 %v864
        %v1090 = vpack.c.b16 %v979, %v978
        %v1091 = vpack.c.b16 %v981, %v980
        %v1092 = vpack.c.b16 %v983, %v982
        %v1093 = vpack.c.b16 %v985, %v984
        %v1094 = vpack.c.b16 %v987, %v986
        %v1095 = vpack.c.b16 %v989, %v988
        %v1096 = vpack.c.b16 %v991, %v990
        %v1097 = vpack.c.b16 %v993, %v992
        %v1098 = vpack.c.b16 %v995, %v994
        %v1099 = vpack.c.b16 %v997, %v996
        %v1100 = vpack.c.b16 %v999, %v998
        %v1101 = vpack.c.b16 %v1001, %v1000
        %v1102 = vpack.c.b16 %v1003, %v1002
        %v1103 = vpack.c.b16 %v1005, %v1004
        %v1104 = vpack.c.b16 %v1007, %v1006
        %v1105 = vpack.c.b16 %v1009, %v1008
        %v1106 = vpack.c.b16 %v1011, %v1010
        %v1107 = vpack.c.b16 %v1013, %v1012
        %v1108 = vpack.c.b16 %v1015, %v1014
        %v1109 = vpack.c.b16 %v1017, %v1016
        %v1110 = vpack.c.b16 %v1019, %v1018
        %v1111 = vpack.c.b16 %v1021, %v1020
        %v1112 = vpack.c.b16 %v1023, %v1022
        %v1113 = vpack.c.b16 %v1025, %v1024
        %v1114 = vpack.c.b16 %v1027, %v1026
        %v1115 = vpack.c.b16 %v1029, %v1028
        %v1116 = vpack.c.b16 %v1031, %v1030
        %v1117 = vpack.c.b16 %v1033, %v1032
        %v1118 = vpack.c.b16 %v1035, %v1034
        %v1119 = vpack.c.b16 %v1037, %v1036
        %v1120 = vpack.c.b16 %v1039, %v1038
        %v1121 = vpack.c.b16 %v1041, %v1040
        %v1122 = vpack.c.b16 %v1043, %v1042
        %v1123 = vpack.c.b16 %v1045, %v1044
        %v1124 = vpack.c.b16 %v1047, %v1046
        %v1125 = vpack.c.b16 %v1049, %v1048
        %v1126 = vpack.c.b16 %v1051, %v1050
        %v1127 = vpack.c.b16 %v1053, %v1052
        %v1128 = vpack.c.b16 %v1055, %v1054
        %v1129 = vpack.c.b16 %v1057, %v1056
        %v1130 = vpack.c.b16 %v1059, %v1058
        %v1131 = vpack.c.b16 %v1061, %v1060
        %v1132 = vpack.c.b16 %v1063, %v1062
        %v1133 = vpack.c.b16 %v1065, %v1064
        %v1134 = vpack.c.b16 %v1067, %v1066
        %v1135 = vpack.c.b16 %v1069, %v1068
        %v1136 = vpack.c.b16 %v1071, %v1070
        %v1137 = vpack.c.b16 %v1073, %v1072
        %v1138 = vpack.c.b16 %v1075, %v1074
        %v1139 = vpack.c.b16 %v1077, %v1076
        %v1140 = vpack.c.b16 %v1079, %v1078
        %v1141 = vpack.c.b16 %v1081, %v1080
        %v1142 = vpack.c.b16 %v1083, %v1082
        %v1143 = vpack.c.b16 %v1085, %v1084
        %v1144 = vpack.c.b16 %v1087, %v1086
        %v1145 = vpack.c.b16 %v1089, %v1088
        %1202 = vmatprep.subr.bf16.mxu0 0
        %1203 = vmatpush1.bf16.msra.mxu0 %v1090
        %1204 = vmatprep.subr.bf16.mxu0 0
        %1205 = vmatpush1.bf16.msra.mxu0 %v1091
        %1206 = vmatprep.subr.bf16.mxu0 0
        %1207 = vmatpush1.bf16.msra.mxu0 %v1092
        %1208 = vmatprep.subr.bf16.mxu0 0
        %1209 = vmatpush1.bf16.msra.mxu0 %v1093
        %1210 = vmatprep.subr.bf16.mxu0 0
        %1211 = vmatpush1.bf16.msra.mxu0 %v1094
        %1212 = vmatprep.subr.bf16.mxu0 0
        %1213 = vmatpush1.bf16.msra.mxu0 %v1095
        %1214 = vmatprep.subr.bf16.mxu0 0
        %1215 = vmatpush1.bf16.msra.mxu0 %v1096
        %1216 = vmatprep.subr.bf16.mxu0 0
        %1217 = vmatpush1.bf16.msra.mxu0 %v1097
        %1218 = vmatprep.subr.bf16.mxu0 0
        %1219 = vmatpush1.bf16.msra.mxu0 %v1098
        %1220 = vmatprep.subr.bf16.mxu0 0
        %1221 = vmatpush1.bf16.msra.mxu0 %v1099
        %1222 = vmatprep.subr.bf16.mxu0 0
        %1223 = vmatpush1.bf16.msra.mxu0 %v1100
        %1224 = vmatprep.subr.bf16.mxu0 0
        %1225 = vmatpush1.bf16.msra.mxu0 %v1101
        %1226 = vmatprep.subr.bf16.mxu0 0
        %1227 = vmatpush1.bf16.msra.mxu0 %v1102
        %1228 = vmatprep.subr.bf16.mxu0 0
        %1229 = vmatpush1.bf16.msra.mxu0 %v1103
        %1230 = vmatprep.subr.bf16.mxu0 0
        %1231 = vmatpush1.bf16.msra.mxu0 %v1104
        %1232 = vmatprep.subr.bf16.mxu0 0
        %1233 = vmatpush1.bf16.msra.mxu0 %v1105
        %1234 = vmatprep.mubr.bf16.mxu0 %v747
        %1235 = vmatmul.mubr.bf16.gmra.mrb[0].mxu0 %v746
        %v1236 = vpop.f32.mrb[0].mxu0
        %v1237 = vadd.f32 %v865, %v1236
        %v1238 = vpop.f32.mrb[0].mxu0
        %v1239 = vpop.f32.mrb[0].mxu0
        %v1240 = vpop.f32.mrb[0].mxu0
        %1241 = vdwg.mxu0
        %1242 = vmatprep.subr.bf16.mxu0 0
        %1243 = vmatpush1.bf16.msra.mxu0 %v1106
        %1244 = vmatprep.subr.bf16.mxu0 0
        %1245 = vmatpush1.bf16.msra.mxu0 %v1107
        %1246 = vmatprep.subr.bf16.mxu0 0
        %1247 = vmatpush1.bf16.msra.mxu0 %v1108
        %1248 = vmatprep.subr.bf16.mxu0 0
        %1249 = vmatpush1.bf16.msra.mxu0 %v1109
        %1250 = vmatprep.subr.bf16.mxu0 0
        %1251 = vmatpush1.bf16.msra.mxu0 %v1110
        %1252 = vmatprep.subr.bf16.mxu0 0
        %1253 = vmatpush1.bf16.msra.mxu0 %v1111
        %1254 = vmatprep.subr.bf16.mxu0 0
        %1255 = vmatpush1.bf16.msra.mxu0 %v1112
        %1256 = vmatprep.subr.bf16.mxu0 0
        %1257 = vmatpush1.bf16.msra.mxu0 %v1113
        %1258 = vmatprep.subr.bf16.mxu0 0
        %1259 = vmatpush1.bf16.msra.mxu0 %v1114
        %1260 = vmatprep.subr.bf16.mxu0 0
        %1261 = vmatpush1.bf16.msra.mxu0 %v1115
        %1262 = vmatprep.subr.bf16.mxu0 0
        %1263 = vmatpush1.bf16.msra.mxu0 %v1116
        %1264 = vmatprep.subr.bf16.mxu0 0
        %1265 = vmatpush1.bf16.msra.mxu0 %v1117
        %1266 = vmatprep.subr.bf16.mxu0 0
        %1267 = vmatpush1.bf16.msra.mxu0 %v1118
        %1268 = vmatprep.subr.bf16.mxu0 0
        %1269 = vmatpush1.bf16.msra.mxu0 %v1119
        %1270 = vmatprep.subr.bf16.mxu0 0
        %1271 = vmatpush1.bf16.msra.mxu0 %v1120
        %1272 = vmatprep.subr.bf16.mxu0 0
        %1273 = vmatpush1.bf16.msra.mxu0 %v1121
        %1274 = vmatprep.mubr.bf16.mxu0 %v749
        %1275 = vmatmul.mubr.bf16.gmra.mrb[0].mxu0 %v748
        %v1276 = vpop.f32.mrb[0].mxu0
        %v1277 = vadd.f32 %v1237, %v1276
        %v1278 = vpop.f32.mrb[0].mxu0
        %v1279 = vpop.f32.mrb[0].mxu0
        %v1280 = vpop.f32.mrb[0].mxu0
        %1281 = vdwg.mxu0
        %1282 = vmatprep.subr.bf16.mxu0 0
        %1283 = vmatpush1.bf16.msra.mxu0 %v1122
        %1284 = vmatprep.subr.bf16.mxu0 0
        %1285 = vmatpush1.bf16.msra.mxu0 %v1123
        %1286 = vmatprep.subr.bf16.mxu0 0
        %1287 = vmatpush1.bf16.msra.mxu0 %v1124
        %1288 = vmatprep.subr.bf16.mxu0 0
        %1289 = vmatpush1.bf16.msra.mxu0 %v1125
        %1290 = vmatprep.subr.bf16.mxu0 0
        %1291 = vmatpush1.bf16.msra.mxu0 %v1126
        %1292 = vmatprep.subr.bf16.mxu0 0
        %1293 = vmatpush1.bf16.msra.mxu0 %v1127
        %1294 = vmatprep.subr.bf16.mxu0 0
        %1295 = vmatpush1.bf16.msra.mxu0 %v1128
        %1296 = vmatprep.subr.bf16.mxu0 0
        %1297 = vmatpush1.bf16.msra.mxu0 %v1129
        %1298 = vmatprep.subr.bf16.mxu0 0
        %1299 = vmatpush1.bf16.msra.mxu0 %v1130
        %1300 = vmatprep.subr.bf16.mxu0 0
        %1301 = vmatpush1.bf16.msra.mxu0 %v1131
        %1302 = vmatprep.subr.bf16.mxu0 0
        %1303 = vmatpush1.bf16.msra.mxu0 %v1132
        %1304 = vmatprep.subr.bf16.mxu0 0
        %1305 = vmatpush1.bf16.msra.mxu0 %v1133
        %1306 = vmatprep.subr.bf16.mxu0 0
        %1307 = vmatpush1.bf16.msra.mxu0 %v1134
        %1308 = vmatprep.subr.bf16.mxu0 0
        %1309 = vmatpush1.bf16.msra.mxu0 %v1135
        %1310 = vmatprep.subr.bf16.mxu0 0
        %1311 = vmatpush1.bf16.msra.mxu0 %v1136
        %1312 = vmatprep.subr.bf16.mxu0 0
        %1313 = vmatpush1.bf16.msra.mxu0 %v1137
        %1314 = vmatprep.mubr.bf16.mxu0 %v751
        %1315 = vmatmul.mubr.bf16.gmra.mrb[0].mxu0 %v750
        %v1316 = vpop.f32.mrb[0].mxu0
        %v1317 = vadd.f32 %v1277, %v1316
        %v1318 = vpop.f32.mrb[0].mxu0
        %v1319 = vpop.f32.mrb[0].mxu0
        %v1320 = vpop.f32.mrb[0].mxu0
        %1321 = vdwg.mxu0
        %1322 = vmatprep.subr.bf16.mxu0 0
        %1323 = vmatpush1.bf16.msra.mxu0 %v1138
        %1324 = vmatprep.subr.bf16.mxu0 0
        %1325 = vmatpush1.bf16.msra.mxu0 %v1139
        %1326 = vmatprep.subr.bf16.mxu0 0
        %1327 = vmatpush1.bf16.msra.mxu0 %v1140
        %1328 = vmatprep.subr.bf16.mxu0 0
        %1329 = vmatpush1.bf16.msra.mxu0 %v1141
        %1330 = vmatprep.subr.bf16.mxu0 0
        %1331 = vmatpush1.bf16.msra.mxu0 %v1142
        %1332 = vmatprep.subr.bf16.mxu0 0
        %1333 = vmatpush1.bf16.msra.mxu0 %v1143
        %1334 = vmatprep.subr.bf16.mxu0 0
        %1335 = vmatpush1.bf16.msra.mxu0 %v1144
        %1336 = vmatprep.subr.bf16.mxu0 0
        %1337 = vmatpush1.bf16.msra.mxu0 %v1145
        %1338 = vmatprep.subr.bf16.mxu0 0
        %1339 = vmatpush1.bf16.msra.mxu0 0
        %1340 = vmatprep.subr.bf16.mxu0 0
        %1341 = vmatpush1.bf16.msra.mxu0 0
        %1342 = vmatprep.subr.bf16.mxu0 0
        %1343 = vmatpush1.bf16.msra.mxu0 0
        %1344 = vmatprep.subr.bf16.mxu0 0
        %1345 = vmatpush1.bf16.msra.mxu0 0
        %1346 = vmatprep.subr.bf16.mxu0 0
        %1347 = vmatpush1.bf16.msra.mxu0 0
        %1348 = vmatprep.subr.bf16.mxu0 0
        %1349 = vmatpush1.bf16.msra.mxu0 0
        %1350 = vmatprep.subr.bf16.mxu0 0
        %1351 = vmatpush1.bf16.msra.mxu0 0
        %1352 = vmatprep.subr.bf16.mxu0 0
        %1353 = vmatpush1.bf16.msra.mxu0 0
        %1354 = vmatprep.mubr.bf16.mxu0 0
        %1355 = vmatmul.mubr.bf16.gmra.mrb[0].mxu0 %v752
        %v1356 = vpop.f32.mrb[0].mxu0
        %v1357 = vadd.f32 %v1317, %v1356
        %v1358 = vpop.f32.mrb[0].mxu0
        %v1359 = vpop.f32.mrb[0].mxu0
        %v1360 = vpop.f32.mrb[0].mxu0
        %1361 = vdwg.mxu0
        %1362 = vst [vmem:[%s262] sm:$0x1] %v1357
        %p1363 = scmp.lt.s32.totalorder %s18, 1
        %s1364 = scalar_select %p1363, %s18, 1
        %s1365 = scalar_lea.vmem %s6, %s1364
        // Predicated region
        $region49: #{encoder_forward.1} parent=43 // pred_check
          %p1366 = pneg %p167
        $region50: #{encoder_forward.1} parent=43 // pred_check_branch
          %1368 = sbr.rel (%p1366) target = $region52
        $region51: #{encoder_forward.1} parent=43 // pred_region
          _
        $region52: #{encoder_forward.1} parent=43 // pred_fallthru
          _
      $region44: #{encoder_forward.1} parent=5 // pred_fallthru
        _
      %p1369 = scmp.le.s32.totalorder 2, %s13
      // Predicated region
      $region53: #{encoder_forward.1} parent=5 // pred_check
        %p1370 = pneg %p1369
      $region54: #{encoder_forward.1} parent=5 // pred_check_branch
        %1372 = sbr.rel (%p1370) target = $region56
      $region55: #{encoder_forward.1} parent=5 // pred_region
        %s1373 = ssub.s32 %s13, 2
        // Predicated region
        $region57: #{encoder_forward.1} parent=55 // pred_check
          %p1374 = pneg %p173
        $region58: #{encoder_forward.1} parent=55 // pred_check_branch
          %1376 = sbr.rel (%p1374) target = $region60
        $region59: #{encoder_forward.1} parent=55 // pred_region
          %p1377 = scmp.lt.s32.totalorder %s19, 1
          %s1378 = scalar_select %p1377, %s19, 1
          %s1379 = scalar_lea.vmem %s6, %s1378
        $region60: #{encoder_forward.1} parent=55 // pred_fallthru
          _
      $region56: #{encoder_forward.1} parent=5 // pred_fallthru
        _
    $region6: #{encoder_forward.1} parent=1 // loop_footer
      %s17 = sadd.s32 1, %s13
    $region7: #{encoder_forward.1} parent=1 // loop_footer_branch
      %12 = sbr.rel target = $region3
    $region8: #{encoder_forward.1} parent=1 // loop_exit
      _
    %1380 = vsyncpa [#allocation3], 1
    %s1381 = scalar_lea.sflag [#allocation3], 1
    %1382 = vsyncpa %s1381, 1

</llo_original>
